<compile_context>
chip_gen: v7x
topology: tpu7x:2x2x1
jax: 0.10.0
libtpu: 0.0.40
codegen_flags: <defaults>
</compile_context>

<pallas_src>
from functools import partial

import jax
import jax.numpy as jnp
from jax.experimental import pallas as pl
from jax.experimental.pallas import tpu as pltpu


def _round_up(a, b):
    return ((a + b - 1) // b) * b


def _vmem_estimate(TB, S, D, H_pad, mm_bytes, ew_bytes):
    """Rough per-step VMEM bytes: double-buffered blocks + kernel temporaries."""
    blocks = 2 * (TB * D * mm_bytes          # x block
                  + TB * S * D * mm_bytes    # context block
                  + TB * S * 2)              # bf16 mask bias block
    params = 2 * (2 * D * H_pad * mm_bytes   # W_in, W_ctx (pipeline double-buffers)
                  + 2 * H_pad * 4            # b_in, b_ctx (f32)
                  + H_pad * ew_bytes)        # V
    outs = 2 * (TB * H_pad * 4 + TB * S * 4)
    # ctx3d (f32) + u (+ broadcast/mul temporaries) + small per-row vectors.
    temps = (TB * S * H_pad * (2 * 4 + 2 * ew_bytes)
             + 4 * TB * S * 4 + 2 * TB * H_pad * 4)
    return blocks + params + outs + temps


def attention_kernel(x_ref, ctx_ref, bias_ref,
                     w_in_ref, b_in_ref, w_ctx_ref, b_ctx_ref, v_ref,
                     hidden_ref, alpha_ref, *, ew_dtype, approx_recip):
    # Block shapes:
    #   x_ref   : (TB, D)        ctx_ref : (TB, S, D)     bias_ref : (TB, S) bf16
    #   w_*     : (D, H_pad)     b_*     : (1, H_pad) f32 v_ref    : (1, H_pad)
    #   hidden  : (TB, H_pad)    alpha   : (TB, S)
    x = x_ref[...]                               # (TB, D)
    c = ctx_ref[...]                             # (TB, S, D)
    TB, S, D = c.shape
    H = w_in_ref.shape[1]                        # == H_pad

    # inp = input_linear(input): (TB, H) in f32 (MXU accumulates in f32).
    inp = jnp.dot(x, w_in_ref[...],
                  preferred_element_type=jnp.float32) + b_in_ref[...]

    # ctx = context_linear(context): per-position linear -> (TB, S, H) f32.
    # NOTE: the reshape is a free relabel when S % 8 == 0 (sublane-aligned).
    ctx2d = jnp.dot(c.reshape(TB * S, D), w_ctx_ref[...],
                    preferred_element_type=jnp.float32) + b_ctx_ref[...]
    ctx3d = ctx2d.reshape(TB, S, H)              # stays f32; reused for hidden

    # att[b, s] = sum_h V[h] * tanh(inp[b, h] + ctx[b, s, h])
    # tanh + V-multiply in ew_dtype (bf16 on v6e/v7x), accumulation in f32.
    u = jnp.tanh((inp[:, None, :] + ctx3d).astype(ew_dtype))        # (TB, S, H)
    att = jnp.sum(u * v_ref[...][None, :, :].astype(ew_dtype),
                  axis=-1, dtype=jnp.float32)                        # (TB, S)

    # Masked positions: additive -inf bias (== PyTorch's att[mask] = -inf,
    # since att is always finite). Fully-masked row -> NaN, PyTorch parity.
    att = att + bias_ref[...].astype(jnp.float32)

    # softmax over the sequence dim, f32.
    att_max = jnp.max(att, axis=-1, keepdims=True)
    e = jnp.exp(att - att_max)
    denom = jnp.sum(e, axis=-1, keepdims=True)
    if approx_recip:
        alpha = e * pl.reciprocal(denom, approx=True)
    else:
        alpha = e / denom
    alpha_ref[...] = alpha.astype(alpha_ref.dtype)

    # hidden = sum_s alpha[b, s] * ctx[b, s, :]   (VPU mul + sublane reduce,
    # avoids an M=1 / K=S MXU drain per row); kept in f32 for accuracy.
    hidden = jnp.sum(alpha[:, :, None] * ctx3d, axis=1)              # (TB, H)
    hidden_ref[...] = hidden.astype(hidden_ref.dtype)


def attention_forward(x, context, mask, w_in, b_in, w_ctx, b_ctx, v, *,
                      block_b=32, use_bf16_matmul=True, use_bf16_elementwise=True):
    """mask: bool (B, S); True means the position is excluded (-inf)."""
    B, D = x.shape
    _, S, _ = context.shape
    H = w_in.shape[1]

    mm_dtype = jnp.bfloat16 if use_bf16_matmul else jnp.float32
    ew_dtype = jnp.bfloat16 if use_bf16_elementwise else jnp.float32
    mm_b = jnp.dtype(mm_dtype).itemsize
    ew_b = jnp.dtype(ew_dtype).itemsize

    H_pad = _round_up(H, 128)            # lane-dense weights / outputs

    # --- batch tile: multiple of 8, >=2 grid steps when possible, VMEM-fit ---
    TB = min(_round_up(block_b, 8), _round_up(B, 8))
    if -(-B // TB) < 2 and TB > 8:       # give v7x's 2 TensorCores >=2 steps
        TB = max(8, _round_up(-(-B // 2), 8))
    budget = 40 * 1024 * 1024            # keeps the working set inside v7x's 64 MiB
    while TB > 8 and _vmem_estimate(TB, S, D, H_pad, mm_b, ew_b) > budget:
        TB -= 8
    B_pad = _round_up(B, TB)

    est = _vmem_estimate(TB, S, D, H_pad, mm_b, ew_b)
    vmem_limit = int(min(64 * 1024 * 1024,
                         max(32 * 1024 * 1024, 1.3 * est + 2 * 1024 * 1024)))

    # --- inputs: pad only along B (at most TB-1 rows); NO S padding of context.
    x_p = jnp.pad(x, ((0, B_pad - B), (0, 0))).astype(mm_dtype)
    ctx_p = jnp.pad(context, ((0, B_pad - B), (0, 0), (0, 0))).astype(mm_dtype)

    # Additive mask bias in bf16 (half the mask DMA of f32). Padded batch rows
    # get bias 0 so they stay finite (and are sliced off anyway).
    bias = jnp.where(mask, -jnp.inf, 0.0).astype(jnp.bfloat16)
    bias_p = jnp.pad(bias, ((0, B_pad - B), (0, 0)))

    # --- parameters: zero-pad H to H_pad (inert), cast matmul operands.
    w_in_p = jnp.pad(w_in, ((0, 0), (0, H_pad - H))).astype(mm_dtype)
    w_ctx_p = jnp.pad(w_ctx, ((0, 0), (0, H_pad - H))).astype(mm_dtype)
    b_in_p = jnp.pad(b_in, ((0, H_pad - H),)).reshape(1, H_pad).astype(jnp.float32)
    b_ctx_p = jnp.pad(b_ctx, ((0, H_pad - H),)).reshape(1, H_pad).astype(jnp.float32)
    v_p = jnp.pad(v, ((0, H_pad - H),)).reshape(1, H_pad).astype(ew_dtype)

    kernel = partial(attention_kernel, ew_dtype=ew_dtype,
                     approx_recip=use_bf16_elementwise)

    grid_spec = pltpu.PrefetchScalarGridSpec(
        num_scalar_prefetch=0,
        grid=(B_pad // TB,),
        in_specs=[
            pl.BlockSpec((TB, D), lambda i: (i, 0)),            # x block
            pl.BlockSpec((TB, S, D), lambda i: (i, 0, 0)),      # context block (full S, D)
            pl.BlockSpec((TB, S), lambda i: (i, 0)),            # mask bias block
            pl.BlockSpec((D, H_pad), lambda i: (0, 0)),         # W_in   (resident)
            pl.BlockSpec((1, H_pad), lambda i: (0, 0)),         # b_in   (resident)
            pl.BlockSpec((D, H_pad), lambda i: (0, 0)),         # W_ctx  (resident)
            pl.BlockSpec((1, H_pad), lambda i: (0, 0)),         # b_ctx  (resident)
            pl.BlockSpec((1, H_pad), lambda i: (0, 0)),         # V      (resident)
        ],
        out_specs=[
            pl.BlockSpec((TB, H_pad), lambda i: (i, 0)),        # hidden_state
            pl.BlockSpec((TB, S), lambda i: (i, 0)),            # alpha
        ],
    )

    hidden_p, alpha_p = pl.pallas_call(
        kernel,
        out_shape=(jax.ShapeDtypeStruct((B_pad, H_pad), jnp.float32),
                   jax.ShapeDtypeStruct((B_pad, S), jnp.float32)),
        grid_spec=grid_spec,
        compiler_params=pltpu.CompilerParams(
            dimension_semantics=("parallel",),
            vmem_limit_bytes=vmem_limit),
    )(x_p, ctx_p, bias_p, w_in_p, b_in_p, w_ctx_p, b_ctx_p, v_p)

    return hidden_p[:B, :H], alpha_p[:B, :S]


def attention_reference(x, context, mask, w_in, b_in, w_ctx, b_ctx, v):
    # Pure-JAX f32 reference mirroring the PyTorch forward.
    inp = x @ w_in + b_in                                    # (B, H)
    ctx = jnp.einsum('bsd,dh->bsh', context, w_ctx) + b_ctx  # (B, S, H)
    u = jnp.tanh(inp[:, None, :] + ctx)                      # (B, S, H)
    att = jnp.einsum('bsh,h->bs', u, v)                      # (B, S)
    att = jnp.where(mask, -jnp.inf, att)
    att_max = jnp.max(att, axis=1, keepdims=True)
    e = jnp.exp(att - att_max)
    alpha = e / jnp.sum(e, axis=1, keepdims=True)
    hidden = jnp.einsum('bsh,bs->bh', ctx, alpha)
    return hidden, alpha


if __name__ == "__main__":
    B, S = 2, 8
    input_dim, hidden_dim = 16, 32

    key = jax.random.PRNGKey(0)
    k = jax.random.split(key, 8)

    # Deterministic parameter init (shapes follow Attention.__init__).
    lin_bound = 1.0 / (input_dim ** 0.5)
    w_in = jax.random.uniform(k[0], (input_dim, hidden_dim), jnp.float32,
                              -lin_bound, lin_bound)
    b_in = jax.random.uniform(k[1], (hidden_dim,), jnp.float32, -lin_bound, lin_bound)
    w_ctx = jax.random.uniform(k[2], (input_dim, hidden_dim), jnp.float32,
                               -lin_bound, lin_bound)
    b_ctx = jax.random.uniform(k[3], (hidden_dim,), jnp.float32, -lin_bound, lin_bound)
    v = jax.random.uniform(k[4], (hidden_dim,), jnp.float32, -1.0, 1.0)

    # Example inputs.
    x = jax.random.normal(k[5], (B, input_dim), jnp.float32)         # decoder hidden state
    context = jax.random.normal(k[6], (B, S, input_dim), jnp.float32)
    mask = jax.random.bernoulli(k[7], 0.25, (B, S))                  # True => masked out

    hidden_ref, alpha_ref = attention_reference(x, context, mask,
                                                w_in, b_in, w_ctx, b_ctx, v)

    # 1) f32 path: exact-semantics validation (tight tolerance).
    hidden_f32, alpha_f32 = attention_forward(
        x, context, mask, w_in, b_in, w_ctx, b_ctx, v,
        use_bf16_matmul=False, use_bf16_elementwise=False)
    jax.block_until_ready((hidden_f32, alpha_f32))
    assert jnp.allclose(hidden_f32, hidden_ref, atol=1e-5, rtol=1e-5)
    assert jnp.allclose(alpha_f32, alpha_ref, atol=1e-5, rtol=1e-5)

    # 2) Default perf path (bf16 MXU operands + bf16 tanh, f32 accumulation):
    #    tolerance is flag-gated (bf16 rounding), per the performance review.
    hidden_bf, alpha_bf = attention_forward(x, context, mask,
                                            w_in, b_in, w_ctx, b_ctx, v)
    jax.block_until_ready((hidden_bf, alpha_bf))
    assert jnp.allclose(hidden_bf, hidden_ref, atol=2e-1, rtol=1e-1)
    assert jnp.allclose(alpha_bf, alpha_ref, atol=5e-2, rtol=1e-1)

    print("KERNEL_OK")
</pallas_src>

<mosaic_0001>
module attributes {stable_mosaic.version = 11 : i64} {
  func.func @attention_kernel(%arg0: i32, %arg1: memref<8x16xf32, #tpu.memory_space<vmem>>, %arg2: memref<8x8x16xf32, #tpu.memory_space<vmem>>, %arg3: memref<8x8xbf16, #tpu.memory_space<vmem>>, %arg4: memref<16x128xf32, #tpu.memory_space<vmem>>, %arg5: memref<1x128xf32, #tpu.memory_space<vmem>>, %arg6: memref<16x128xf32, #tpu.memory_space<vmem>>, %arg7: memref<1x128xf32, #tpu.memory_space<vmem>>, %arg8: memref<1x128xf32, #tpu.memory_space<vmem>>, %arg9: memref<8x128xf32, #tpu.memory_space<vmem>>, %arg10: memref<8x8xf32, #tpu.memory_space<vmem>>) attributes {dimension_semantics = [#tpu.dimension_semantics<parallel>], iteration_bounds = array<i64: 1>, scalar_prefetch = 0 : i64, scratch_operands = 0 : i64, tpu.core_type = #tpu.core_type<tc>, window_params = [{transform_indices = @transform_0, window_bounds = array<i64: 8, 16>}, {transform_indices = @transform_1, window_bounds = array<i64: 8, 8, 16>}, {transform_indices = @transform_2, window_bounds = array<i64: 8, 8>}, {pipeline_mode = #tpu.pipeline_mode<synchronous>, transform_indices = @transform_3, window_bounds = array<i64: 16, 128>}, {pipeline_mode = #tpu.pipeline_mode<synchronous>, transform_indices = @transform_4, window_bounds = array<i64: 1, 128>}, {pipeline_mode = #tpu.pipeline_mode<synchronous>, transform_indices = @transform_5, window_bounds = array<i64: 16, 128>}, {pipeline_mode = #tpu.pipeline_mode<synchronous>, transform_indices = @transform_6, window_bounds = array<i64: 1, 128>}, {pipeline_mode = #tpu.pipeline_mode<synchronous>, transform_indices = @transform_7, window_bounds = array<i64: 1, 128>}, {transform_indices = @transform_8, window_bounds = array<i64: 8, 128>}, {transform_indices = @transform_9, window_bounds = array<i64: 8, 8>}]} {
    %c0 = arith.constant 0 : index
    %c0_0 = arith.constant 0 : index
    %0 = vector.load %arg1[%c0, %c0_0] : memref<8x16xf32, #tpu.memory_space<vmem>>, vector<8x16xf32>
    %c0_1 = arith.constant 0 : index
    %c0_2 = arith.constant 0 : index
    %c0_3 = arith.constant 0 : index
    %1 = vector.load %arg2[%c0_1, %c0_2, %c0_3] : memref<8x8x16xf32, #tpu.memory_space<vmem>>, vector<8x8x16xf32>
    %c0_4 = arith.constant 0 : index
    %c0_5 = arith.constant 0 : index
    %2 = vector.load %arg4[%c0_4, %c0_5] : memref<16x128xf32, #tpu.memory_space<vmem>>, vector<16x128xf32>
    %cst = arith.constant dense<0.000000e+00> : vector<8x128xf32>
    %3 = tpu.matmul %0, %2, %cst {dimension_numbers = #tpu.dot_dimension_numbers<[1], [0], [0], [1], [0, 0, 1, 1], [], []>} : vector<8x16xf32>, vector<16x128xf32>, vector<8x128xf32> -> vector<8x128xf32>
    %c0_6 = arith.constant 0 : index
    %c0_7 = arith.constant 0 : index
    %4 = vector.load %arg5[%c0_6, %c0_7] : memref<1x128xf32, #tpu.memory_space<vmem>>, vector<1x128xf32>
    %5 = vector.broadcast %4 : vector<1x128xf32> to vector<8x128xf32>
    %6 = arith.addf %3, %5 : vector<8x128xf32>
    %7 = vector.shape_cast %1 : vector<8x8x16xf32> to vector<64x16xf32>
    %c0_8 = arith.constant 0 : index
    %c0_9 = arith.constant 0 : index
    %8 = vector.load %arg6[%c0_8, %c0_9] : memref<16x128xf32, #tpu.memory_space<vmem>>, vector<16x128xf32>
    %cst_10 = arith.constant dense<0.000000e+00> : vector<64x128xf32>
    %9 = tpu.matmul %7, %8, %cst_10 {dimension_numbers = #tpu.dot_dimension_numbers<[1], [0], [0], [1], [0, 0, 1, 1], [], []>} : vector<64x16xf32>, vector<16x128xf32>, vector<64x128xf32> -> vector<64x128xf32>
    %c0_11 = arith.constant 0 : index
    %c0_12 = arith.constant 0 : index
    %10 = vector.load %arg7[%c0_11, %c0_12] : memref<1x128xf32, #tpu.memory_space<vmem>>, vector<1x128xf32>
    %11 = vector.broadcast %10 : vector<1x128xf32> to vector<64x128xf32>
    %12 = arith.addf %9, %11 : vector<64x128xf32>
    %13 = vector.shape_cast %12 : vector<64x128xf32> to vector<8x8x128xf32>
    %14 = vector.shape_cast %6 : vector<8x128xf32> to vector<8x1x128xf32>
    %15 = vector.broadcast %14 : vector<8x1x128xf32> to vector<8x8x128xf32>
    %16 = arith.addf %15, %13 : vector<8x8x128xf32>
    %17 = math.tanh %16 : vector<8x8x128xf32>
    %c0_13 = arith.constant 0 : index
    %c0_14 = arith.constant 0 : index
    %18 = vector.load %arg8[%c0_13, %c0_14] : memref<1x128xf32, #tpu.memory_space<vmem>>, vector<1x128xf32>
    %19 = vector.shape_cast %18 : vector<1x128xf32> to vector<1x1x128xf32>
    %20 = vector.broadcast %19 : vector<1x1x128xf32> to vector<8x8x128xf32>
    %21 = arith.mulf %17, %20 : vector<8x8x128xf32>
    %cst_15 = arith.constant dense<0.000000e+00> : vector<8x8xf32>
    %22 = vector.multi_reduction <add>, %21, %cst_15 [2] : vector<8x8x128xf32> to vector<8x8xf32>
    %c0_16 = arith.constant 0 : index
    %c0_17 = arith.constant 0 : index
    %23 = vector.load %arg3[%c0_16, %c0_17] : memref<8x8xbf16, #tpu.memory_space<vmem>>, vector<8x8xbf16>
    %24 = arith.extf %23 : vector<8x8xbf16> to vector<8x8xf32>
    %25 = arith.addf %22, %24 : vector<8x8xf32>
    %cst_18 = arith.constant dense<0xFF800000> : vector<8xf32>
    %26 = vector.multi_reduction <maximumf>, %25, %cst_18 [1] : vector<8x8xf32> to vector<8xf32>
    %27 = vector.shape_cast %26 : vector<8xf32> to vector<8x1xf32>
    %28 = vector.broadcast %27 : vector<8x1xf32> to vector<8x8xf32>
    %29 = arith.subf %25, %28 : vector<8x8xf32>
    %30 = math.exp %29 : vector<8x8xf32>
    %cst_19 = arith.constant dense<0.000000e+00> : vector<8xf32>
    %31 = vector.multi_reduction <add>, %30, %cst_19 [1] : vector<8x8xf32> to vector<8xf32>
    %32 = vector.shape_cast %31 : vector<8xf32> to vector<8x1xf32>
    %33 = vector.broadcast %32 : vector<8x1xf32> to vector<8x8xf32>
    %34 = arith.divf %30, %33 : vector<8x8xf32>
    %c0_20 = arith.constant 0 : index
    %c0_21 = arith.constant 0 : index
    %35 = vector.load %arg10[%c0_20, %c0_21] : memref<8x8xf32, #tpu.memory_space<vmem>>, vector<8x8xf32>
    tpu.vector_store %arg10[%c0_20, %c0_21], %34 {strides = array<i32>} : memref<8x8xf32, #tpu.memory_space<vmem>>, vector<8x8xf32>,
    %36 = vector.shape_cast %34 : vector<8x8xf32> to vector<8x8x1xf32>
    %37 = vector.broadcast %36 : vector<8x8x1xf32> to vector<8x8x128xf32>
    %38 = arith.mulf %37, %13 : vector<8x8x128xf32>
    %cst_22 = arith.constant dense<0.000000e+00> : vector<8x128xf32>
    %39 = vector.multi_reduction <add>, %38, %cst_22 [1] : vector<8x8x128xf32> to vector<8x128xf32>
    %c0_23 = arith.constant 0 : index
    %c0_24 = arith.constant 0 : index
    %40 = vector.load %arg9[%c0_23, %c0_24] : memref<8x128xf32, #tpu.memory_space<vmem>>, vector<8x128xf32>
    tpu.vector_store %arg9[%c0_23, %c0_24], %39 {strides = array<i32>} : memref<8x128xf32, #tpu.memory_space<vmem>>, vector<8x128xf32>,
    return
  }
  func.func @transform_0(%arg0: i32) -> (i32, i32) {
    %c0_i32 = arith.constant 0 : i32
    %c0_i32_0 = arith.constant 0 : i32
    return %arg0, %c0_i32 : i32, i32
  }
  func.func @transform_1(%arg0: i32) -> (i32, i32, i32) {
    %c0_i32 = arith.constant 0 : i32
    %c0_i32_0 = arith.constant 0 : i32
    %c0_i32_1 = arith.constant 0 : i32
    return %arg0, %c0_i32, %c0_i32_0 : i32, i32, i32
  }
  func.func @transform_2(%arg0: i32) -> (i32, i32) {
    %c0_i32 = arith.constant 0 : i32
    %c0_i32_0 = arith.constant 0 : i32
    return %arg0, %c0_i32 : i32, i32
  }
  func.func @transform_3(%arg0: i32) -> (i32, i32) {
    %c0_i32 = arith.constant 0 : i32
    %c0_i32_0 = arith.constant 0 : i32
    %c0_i32_1 = arith.constant 0 : i32
    return %c0_i32, %c0_i32_0 : i32, i32
  }
  func.func @transform_4(%arg0: i32) -> (i32, i32) {
    %c0_i32 = arith.constant 0 : i32
    %c0_i32_0 = arith.constant 0 : i32
    %c0_i32_1 = arith.constant 0 : i32
    return %c0_i32, %c0_i32_0 : i32, i32
  }
  func.func @transform_5(%arg0: i32) -> (i32, i32) {
    %c0_i32 = arith.constant 0 : i32
    %c0_i32_0 = arith.constant 0 : i32
    %c0_i32_1 = arith.constant 0 : i32
    return %c0_i32, %c0_i32_0 : i32, i32
  }
  func.func @transform_6(%arg0: i32) -> (i32, i32) {
    %c0_i32 = arith.constant 0 : i32
    %c0_i32_0 = arith.constant 0 : i32
    %c0_i32_1 = arith.constant 0 : i32
    return %c0_i32, %c0_i32_0 : i32, i32
  }
  func.func @transform_7(%arg0: i32) -> (i32, i32) {
    %c0_i32 = arith.constant 0 : i32
    %c0_i32_0 = arith.constant 0 : i32
    %c0_i32_1 = arith.constant 0 : i32
    return %c0_i32, %c0_i32_0 : i32, i32
  }
  func.func @transform_8(%arg0: i32) -> (i32, i32) {
    %c0_i32 = arith.constant 0 : i32
    %c0_i32_0 = arith.constant 0 : i32
    return %arg0, %c0_i32 : i32, i32
  }
  func.func @transform_9(%arg0: i32) -> (i32, i32) {
    %c0_i32 = arith.constant 0 : i32
    %c0_i32_0 = arith.constant 0 : i32
    return %arg0, %c0_i32 : i32, i32
  }
}

</mosaic_0001>

<llo_original>
// kernel: tpu_custom_call.1
$region0: #{tpu_custom_call.1}
  #allocation0 [shape = 'u32[]', space=smem, size = 0x4, offset = 0x4, fixed_abs, tag = 'smem constant byte address 0x4 - core index']
  #allocation1 [shape = 'u32[144,128]{1,0:T(1,128)}', space=vmem, size = 0x12000, scoped, tag = 'internal scratch']
  %s0 = inlined_call_operand.hbm [shape: f32[8,16], index: 0, kind: input, shape index: {}]
  %s1 = inlined_call_operand.hbm [shape: f32[8,8,16], index: 1, kind: input, shape index: {}]
  %s2 = inlined_call_operand.hbm [shape: bf16[8,8], index: 2, kind: input, shape index: {}]
  %s3 = inlined_call_operand.hbm [shape: f32[16,128], index: 3, kind: input, shape index: {}]
  %s4 = inlined_call_operand.vmem [shape: f32[1,128], index: 4, kind: input, shape index: {}]
  %s5 = inlined_call_operand.vmem [shape: f32[16,128], index: 5, kind: input, shape index: {}]
  %s6 = inlined_call_operand.vmem [shape: f32[1,128], index: 6, kind: input, shape index: {}]
  %s7 = inlined_call_operand.vmem [shape: f32[1,128], index: 7, kind: input, shape index: {}]
  %s8 = inlined_call_operand.hbm [shape: f32[8,128], index: 8, kind: output, shape index: {0}]
  %s9 = inlined_call_operand.hbm [shape: f32[8,8], index: 9, kind: output, shape index: {1}]
  %10 = xla_tuple %s8, %s9
  %s11 = sld [smem:[#allocation0]]
  $region66: #{tpu_custom_call.1} parent=0
    _
  %s13 = ssub.s32 1, %s11
  %s14 = scalar_select 0, %s13, %s11
  $region1: #{tpu_custom_call.1} parent=0
    #allocation2 [shape = 'u8[4096]{0}', space=vmem, size = 0x1000, scoped, tag = 'input window, operand 0, single buffered']
    #allocation3 [shape = 's32[1]{0}', space=sflag, size = 0x4, scoped, tag = 'scoped memory for tpu_custom_call.1']
    #allocation4 [shape = 's32[1]{0}', space=sflag, size = 0x4, scoped, tag = 'scoped memory for tpu_custom_call.1']
    #allocation5 [shape = 'u8[32768]{0}', space=vmem, size = 0x8000, scoped, tag = 'input window, operand 1, single buffered']
    #allocation6 [shape = 's32[1]{0}', space=sflag, size = 0x4, scoped, tag = 'scoped memory for tpu_custom_call.1']
    #allocation7 [shape = 'u8[2048]{0}', space=vmem, size = 0x800, scoped, tag = 'input window, operand 2, single buffered']
    #allocation8 [shape = 'u8[8192]{0}', space=vmem, size = 0x2000, scoped, tag = 'input window, operand 3, single buffered']
    #allocation9 [shape = 's32[1]{0}', space=sflag, size = 0x4, scoped, tag = 'scoped memory for tpu_custom_call.1']
    #allocation10 [shape = 'u8[4096]{0}', space=vmem, size = 0x1000, scoped, tag = 'output window, operand 0, single buffered']
    #allocation11 [shape = 'u8[4096]{0}', space=vmem, size = 0x1000, scoped, tag = 'output window, operand 1, single buffered']
    #allocation12 [shape = 's32[1]{0}', space=sflag, size = 0x4, scoped, tag = 'scoped memory for tpu_custom_call.1']
    %15 = vsyncpa [#allocation3], 0
    %16 = vsyncpa [#allocation6], 0
    %17 = vsyncpa [#allocation9], 0
    %18 = vsyncpa [#allocation4], 0
    %19 = vsyncpa [#allocation12], 0
    // Predicated region
    $region2: #{tpu_custom_call.1} parent=1 // pred_check
      _
    $region3: #{tpu_custom_call.1} parent=1 // pred_check_branch
      %21 = sbr.rel (0) target = $region5
    $region4: #{tpu_custom_call.1} parent=1 // pred_region
      %s23 = ssub.s32 128, 128
      %24 = vsyncadd [#allocation3], %s23
      %s26 = sshll.u32 [#allocation2], 4
      %s27 = int_to_ptr.vmem [resolvable:$true] %s26
      %29 = dma.hbm_to_vmem [thread:$0]  %s0, 128, %s27, [#allocation3]
    $region5: #{tpu_custom_call.1} parent=1 // pred_fallthru
      _
    // Predicated region
    $region6: #{tpu_custom_call.1} parent=1 // pred_check
      _
    $region7: #{tpu_custom_call.1} parent=1 // pred_check_branch
      %31 = sbr.rel (0) target = $region9
    $region8: #{tpu_custom_call.1} parent=1 // pred_region
      %s33 = ssub.s32 1024, 1024
      %34 = vsyncadd [#allocation6], %s33
      %s35 = sshll.u32 [#allocation5], 4
      %s36 = int_to_ptr.vmem [resolvable:$true] %s35
      %41 = dma.hbm_to_vmem [thread:$0]  %s1, 1024, %s36, [#allocation6], 128, 128, 8
    $region9: #{tpu_custom_call.1} parent=1 // pred_fallthru
      _
    // Predicated region
    $region10: #{tpu_custom_call.1} parent=1 // pred_check
      _
    $region11: #{tpu_custom_call.1} parent=1 // pred_check_branch
      %43 = sbr.rel (0) target = $region13
    $region12: #{tpu_custom_call.1} parent=1 // pred_region
      %s45 = ssub.s32 64, 64
      %46 = vsyncadd [#allocation6], %s45
      %s48 = sshll.u32 [#allocation7], 4
      %s49 = int_to_ptr.vmem [resolvable:$true] %s48
      %51 = dma.hbm_to_vmem [thread:$0]  %s2, 64, %s49, [#allocation6]
    $region13: #{tpu_custom_call.1} parent=1 // pred_fallthru
      _
    // Predicated region
    $region14: #{tpu_custom_call.1} parent=1 // pred_check
      _
    $region15: #{tpu_custom_call.1} parent=1 // pred_check_branch
      %53 = sbr.rel (0) target = $region17
    $region16: #{tpu_custom_call.1} parent=1 // pred_region
      %s55 = ssub.s32 256, 256
      %56 = vsyncadd [#allocation9], %s55
      %s57 = sshll.u32 [#allocation8], 4
      %s58 = int_to_ptr.vmem [resolvable:$true] %s57
      %63 = dma.hbm_to_vmem [thread:$0]  %s3, 256, %s58, [#allocation9], 128, 128, 8
    $region17: #{tpu_custom_call.1} parent=1 // pred_fallthru
      _
    // Predicated region
    $region18: #{tpu_custom_call.1} parent=1 // pred_check
      _
    $region19: #{tpu_custom_call.1} parent=1 // pred_check_branch
      %65 = sbr.rel (0) target = $region21
    $region20: #{tpu_custom_call.1} parent=1 // pred_region
      _
    $region21: #{tpu_custom_call.1} parent=1 // pred_fallthru
      _
    // Predicated region
    $region22: #{tpu_custom_call.1} parent=1 // pred_check
      _
    $region23: #{tpu_custom_call.1} parent=1 // pred_check_branch
      %67 = sbr.rel (0) target = $region25
    $region24: #{tpu_custom_call.1} parent=1 // pred_region
      _
    $region25: #{tpu_custom_call.1} parent=1 // pred_fallthru
      _
    // Predicated region
    $region26: #{tpu_custom_call.1} parent=1 // pred_check
      _
    $region27: #{tpu_custom_call.1} parent=1 // pred_check_branch
      %69 = sbr.rel (0) target = $region29
    $region28: #{tpu_custom_call.1} parent=1 // pred_region
      _
    $region29: #{tpu_custom_call.1} parent=1 // pred_fallthru
      _
    // Predicated region
    $region30: #{tpu_custom_call.1} parent=1 // pred_check
      _
    $region31: #{tpu_custom_call.1} parent=1 // pred_check_branch
      %71 = sbr.rel (0) target = $region33
    $region32: #{tpu_custom_call.1} parent=1 // pred_region
      _
    $region33: #{tpu_custom_call.1} parent=1 // pred_fallthru
      _
    // Predicated region
    $region34: #{tpu_custom_call.1} parent=1 // pred_check
      _
    $region35: #{tpu_custom_call.1} parent=1 // pred_check_branch
      %73 = sbr.rel (0) target = $region37
    $region36: #{tpu_custom_call.1} parent=1 // pred_region
      %74 = dma.done [#allocation3], 128
    $region37: #{tpu_custom_call.1} parent=1 // pred_fallthru
      _
    // Predicated region
    $region38: #{tpu_custom_call.1} parent=1 // pred_check
      _
    $region39: #{tpu_custom_call.1} parent=1 // pred_check_branch
      %76 = sbr.rel (0) target = $region41
    $region40: #{tpu_custom_call.1} parent=1 // pred_region
      %77 = dma.done [#allocation6], 1024
    $region41: #{tpu_custom_call.1} parent=1 // pred_fallthru
      _
    // Predicated region
    $region42: #{tpu_custom_call.1} parent=1 // pred_check
      _
    $region43: #{tpu_custom_call.1} parent=1 // pred_check_branch
      %79 = sbr.rel (0) target = $region45
    $region44: #{tpu_custom_call.1} parent=1 // pred_region
      %80 = dma.done [#allocation6], 64
    $region45: #{tpu_custom_call.1} parent=1 // pred_fallthru
      _
    // Predicated region
    $region46: #{tpu_custom_call.1} parent=1 // pred_check
      _
    $region47: #{tpu_custom_call.1} parent=1 // pred_check_branch
      %82 = sbr.rel (0) target = $region49
    $region48: #{tpu_custom_call.1} parent=1 // pred_region
      %83 = dma.done [#allocation9], 256
    $region49: #{tpu_custom_call.1} parent=1 // pred_fallthru
      _
    %v84 = vld [vmem:[#allocation2] sm:$0xff]
    %v85 = vld [vmem:[#allocation5] sm:$0xff]
    %v86 = vld [vmem:[#allocation5 + $0x8] sm:$0xff]
    %v87 = vld [vmem:[#allocation5 + $0x10] sm:$0xff]
    %v88 = vld [vmem:[#allocation5 + $0x18] sm:$0xff]
    %v89 = vld [vmem:[#allocation5 + $0x20] sm:$0xff]
    %v90 = vld [vmem:[#allocation5 + $0x28] sm:$0xff]
    %v91 = vld [vmem:[#allocation5 + $0x30] sm:$0xff]
    %v92 = vld [vmem:[#allocation5 + $0x38] sm:$0xff]
    %v93 = vld [vmem:[#allocation8] sm:$0xff]
    %v94 = vld [vmem:[#allocation8 + $0x8] sm:$0xff]
    %v95 = vld [vmem:[%s4] sm:$0x1]
    %v97 = vlaneseq
    %v98 = vshrl.u32 %v97, 7
    %v99 = vsub.s32 0, %v98
    %v100 = vrot.slane %v95, %v99
    %vm102 = vcmask 130048
    %v104 = vsel %vm102, %v84, 0
    %106 = vmatprep.subr.mxu0 0.0
    %107 = vmatpush1.msra.mxu0 %v93
    %108 = vmatprep.subr.mxu0 0.0
    %109 = vmatpush1.msra.mxu0 %v94
    %110 = vmatprep.subr.mxu0 0.0
    %111 = vmatpush1.msra.mxu0 0.0
    %112 = vmatprep.subr.mxu0 0.0
    %113 = vmatpush1.msra.mxu0 0.0
    %114 = vmatprep.subr.mxu0 0.0
    %115 = vmatpush1.msra.mxu0 0.0
    %116 = vmatprep.subr.mxu0 0.0
    %117 = vmatpush1.msra.mxu0 0.0
    %118 = vmatprep.subr.mxu0 0.0
    %119 = vmatpush1.msra.mxu0 0.0
    %120 = vmatprep.subr.mxu0 0.0
    %121 = vmatpush1.msra.mxu0 0.0
    %122 = vmatprep.subr.mxu0 0.0
    %123 = vmatpush1.msra.mxu0 0.0
    %124 = vmatprep.subr.mxu0 0.0
    %125 = vmatpush1.msra.mxu0 0.0
    %126 = vmatprep.subr.mxu0 0.0
    %127 = vmatpush1.msra.mxu0 0.0
    %128 = vmatprep.subr.mxu0 0.0
    %129 = vmatpush1.msra.mxu0 0.0
    %130 = vmatprep.subr.mxu0 0.0
    %131 = vmatpush1.msra.mxu0 0.0
    %132 = vmatprep.subr.mxu0 0.0
    %133 = vmatpush1.msra.mxu0 0.0
    %134 = vmatprep.subr.mxu0 0.0
    %135 = vmatpush1.msra.mxu0 0.0
    %136 = vmatprep.subr.mxu0 0.0
    %137 = vmatpush1.msra.mxu0 0.0
    %138 = vmatprep.subr.mxu0 0.0
    %139 = vmatpush1.msra.mxu0 0.0
    %140 = vmatprep.subr.mxu0 0.0
    %141 = vmatpush1.msra.mxu0 0.0
    %142 = vmatprep.subr.mxu0 0.0
    %143 = vmatpush1.msra.mxu0 0.0
    %144 = vmatprep.subr.mxu0 0.0
    %145 = vmatpush1.msra.mxu0 0.0
    %146 = vmatprep.subr.mxu0 0.0
    %147 = vmatpush1.msra.mxu0 0.0
    %148 = vmatprep.subr.mxu0 0.0
    %149 = vmatpush1.msra.mxu0 0.0
    %150 = vmatprep.subr.mxu0 0.0
    %151 = vmatpush1.msra.mxu0 0.0
    %152 = vmatprep.subr.mxu0 0.0
    %153 = vmatpush1.msra.mxu0 0.0
    %154 = vmatprep.subr.mxu0 0.0
    %155 = vmatpush1.msra.mxu0 0.0
    %156 = vmatprep.subr.mxu0 0.0
    %157 = vmatpush1.msra.mxu0 0.0
    %158 = vmatprep.subr.mxu0 0.0
    %159 = vmatpush1.msra.mxu0 0.0
    %160 = vmatprep.subr.mxu0 0.0
    %161 = vmatpush1.msra.mxu0 0.0
    %162 = vmatprep.subr.mxu0 0.0
    %163 = vmatpush1.msra.mxu0 0.0
    %164 = vmatprep.subr.mxu0 0.0
    %165 = vmatpush1.msra.mxu0 0.0
    %166 = vmatprep.subr.mxu0 0.0
    %167 = vmatpush1.msra.mxu0 0.0
    %168 = vmatprep.subr.mxu0 0.0
    %169 = vmatpush1.msra.mxu0 0.0
    %170 = vmatprep.mubr.f32.mxu0 0.0
    %171 = vmatmul.mubr.f32.gmra.mrb[0].mxu0 %v104
    %v172 = vpop.f32.mrb[0].mxu0
    %v173 = vadd.f32 %v100, %v172
    %v174 = vpop.f32.mrb[0].mxu0
    %175 = vdwg.mxu0
    %v176 = vld [vmem:[%s5] sm:$0xff]
    %v177 = vld [vmem:[%s5 + $0x8] sm:$0xff]
    %v178 = vld [vmem:[%s6] sm:$0x1]
    %v180 = vlaneseq
    %v181 = vshrl.u32 %v180, 7
    %v182 = vsub.s32 0, %v181
    %v183 = vrot.slane %v178, %v182
    %v186 = vsel %vm102, %v85, 0
    %v189 = vsel %vm102, %v86, 0
    %v192 = vsel %vm102, %v87, 0
    %v195 = vsel %vm102, %v88, 0
    %v198 = vsel %vm102, %v89, 0
    %v201 = vsel %vm102, %v90, 0
    %v204 = vsel %vm102, %v91, 0
    %v207 = vsel %vm102, %v92, 0
    %209 = vmatprep.subr.mxu0 0.0
    %210 = vmatpush1.msra.mxu0 %v176
    %211 = vmatprep.subr.mxu0 0.0
    %212 = vmatpush1.msra.mxu0 %v177
    %213 = vmatprep.subr.mxu0 0.0
    %214 = vmatpush1.msra.mxu0 0.0
    %215 = vmatprep.subr.mxu0 0.0
    %216 = vmatpush1.msra.mxu0 0.0
    %217 = vmatprep.subr.mxu0 0.0
    %218 = vmatpush1.msra.mxu0 0.0
    %219 = vmatprep.subr.mxu0 0.0
    %220 = vmatpush1.msra.mxu0 0.0
    %221 = vmatprep.subr.mxu0 0.0
    %222 = vmatpush1.msra.mxu0 0.0
    %223 = vmatprep.subr.mxu0 0.0
    %224 = vmatpush1.msra.mxu0 0.0
    %225 = vmatprep.subr.mxu0 0.0
    %226 = vmatpush1.msra.mxu0 0.0
    %227 = vmatprep.subr.mxu0 0.0
    %228 = vmatpush1.msra.mxu0 0.0
    %229 = vmatprep.subr.mxu0 0.0
    %230 = vmatpush1.msra.mxu0 0.0
    %231 = vmatprep.subr.mxu0 0.0
    %232 = vmatpush1.msra.mxu0 0.0
    %233 = vmatprep.subr.mxu0 0.0
    %234 = vmatpush1.msra.mxu0 0.0
    %235 = vmatprep.subr.mxu0 0.0
    %236 = vmatpush1.msra.mxu0 0.0
    %237 = vmatprep.subr.mxu0 0.0
    %238 = vmatpush1.msra.mxu0 0.0
    %239 = vmatprep.subr.mxu0 0.0
    %240 = vmatpush1.msra.mxu0 0.0
    %241 = vmatprep.subr.mxu0 0.0
    %242 = vmatpush1.msra.mxu0 0.0
    %243 = vmatprep.subr.mxu0 0.0
    %244 = vmatpush1.msra.mxu0 0.0
    %245 = vmatprep.subr.mxu0 0.0
    %246 = vmatpush1.msra.mxu0 0.0
    %247 = vmatprep.subr.mxu0 0.0
    %248 = vmatpush1.msra.mxu0 0.0
    %249 = vmatprep.subr.mxu0 0.0
    %250 = vmatpush1.msra.mxu0 0.0
    %251 = vmatprep.subr.mxu0 0.0
    %252 = vmatpush1.msra.mxu0 0.0
    %253 = vmatprep.subr.mxu0 0.0
    %254 = vmatpush1.msra.mxu0 0.0
    %255 = vmatprep.subr.mxu0 0.0
    %256 = vmatpush1.msra.mxu0 0.0
    %257 = vmatprep.subr.mxu0 0.0
    %258 = vmatpush1.msra.mxu0 0.0
    %259 = vmatprep.subr.mxu0 0.0
    %260 = vmatpush1.msra.mxu0 0.0
    %261 = vmatprep.subr.mxu0 0.0
    %262 = vmatpush1.msra.mxu0 0.0
    %263 = vmatprep.subr.mxu0 0.0
    %264 = vmatpush1.msra.mxu0 0.0
    %265 = vmatprep.subr.mxu0 0.0
    %266 = vmatpush1.msra.mxu0 0.0
    %267 = vmatprep.subr.mxu0 0.0
    %268 = vmatpush1.msra.mxu0 0.0
    %269 = vmatprep.subr.mxu0 0.0
    %270 = vmatpush1.msra.mxu0 0.0
    %271 = vmatprep.subr.mxu0 0.0
    %272 = vmatpush1.msra.mxu0 0.0
    %273 = vmatprep.mubr.f32.mxu0 0.0
    %274 = vmatmul.mubr.f32.gmra.mrb[0].mxu0 %v186
    %v275 = vpop.f32.mrb[0].mxu0
    %v276 = vadd.f32 %v183, %v275
    %v277 = vpop.f32.mrb[0].mxu0
    %278 = vmatprep.mubr.f32.mxu0 0.0
    %279 = vmatmul.mubr.f32.gmra.mrb[0].mxu0 %v189
    %v280 = vpop.f32.mrb[0].mxu0
    %v281 = vadd.f32 %v183, %v280
    %v282 = vpop.f32.mrb[0].mxu0
    %283 = vmatprep.mubr.f32.mxu0 0.0
    %284 = vmatmul.mubr.f32.gmra.mrb[0].mxu0 %v192
    %v285 = vpop.f32.mrb[0].mxu0
    %v286 = vadd.f32 %v183, %v285
    %v287 = vpop.f32.mrb[0].mxu0
    %288 = vmatprep.mubr.f32.mxu0 0.0
    %289 = vmatmul.mubr.f32.gmra.mrb[0].mxu0 %v195
    %v290 = vpop.f32.mrb[0].mxu0
    %v291 = vadd.f32 %v183, %v290
    %v292 = vpop.f32.mrb[0].mxu0
    %293 = vmatprep.mubr.f32.mxu0 0.0
    %294 = vmatmul.mubr.f32.gmra.mrb[0].mxu0 %v198
    %v295 = vpop.f32.mrb[0].mxu0
    %v296 = vadd.f32 %v183, %v295
    %v297 = vpop.f32.mrb[0].mxu0
    %298 = vmatprep.mubr.f32.mxu0 0.0
    %299 = vmatmul.mubr.f32.gmra.mrb[0].mxu0 %v201
    %v300 = vpop.f32.mrb[0].mxu0
    %v301 = vadd.f32 %v183, %v300
    %v302 = vpop.f32.mrb[0].mxu0
    %303 = vmatprep.mubr.f32.mxu0 0.0
    %304 = vmatmul.mubr.f32.gmra.mrb[0].mxu0 %v204
    %v305 = vpop.f32.mrb[0].mxu0
    %v306 = vadd.f32 %v183, %v305
    %v307 = vpop.f32.mrb[0].mxu0
    %308 = vmatprep.mubr.f32.mxu0 0.0
    %309 = vmatmul.mubr.f32.gmra.mrb[0].mxu0 %v207
    %v310 = vpop.f32.mrb[0].mxu0
    %v311 = vadd.f32 %v183, %v310
    %v312 = vpop.f32.mrb[0].mxu0
    %313 = vdwg.mxu0
    %v315 = vcombine.high %v173, %v173
    %v317 = vunpack.c.l.s4 1966171168
    %v318 = vunpack.c.0.s8 %v317
    %v319 = vlaneseq
    %v320 = vshrl.u32 %v319, 7
    %v321 = vsub.s32 %v318, %v320
    %v322 = vrot.slane %v173, %v321
    %v324 = vunpack.c.l.s4 1966171168
    %v325 = vunpack.c.0.s8 %v324
    %v326 = vlaneseq
    %v327 = vshrl.u32 %v326, 7
    %v328 = vsub.s32 %v325, %v327
    %v329 = vrot.slane %v315, %v328
    %v330 = vcombine.high %v322, %v322
    %v331 = vcombine.high %v329, %v329
    %v333 = vunpack.c.l.s4 1966171168
    %v334 = vunpack.c.0.s8 %v333
    %v335 = vlaneseq
    %v336 = vshrl.u32 %v335, 7
    %v337 = vsub.s32 %v334, %v336
    %v338 = vrot.slane %v322, %v337
    %v340 = vunpack.c.l.s4 1966171168
    %v341 = vunpack.c.0.s8 %v340
    %v342 = vlaneseq
    %v343 = vshrl.u32 %v342, 7
    %v344 = vsub.s32 %v341, %v343
    %v345 = vrot.slane %v329, %v344
    %v347 = vunpack.c.l.s4 1966171168
    %v348 = vunpack.c.0.s8 %v347
    %v349 = vlaneseq
    %v350 = vshrl.u32 %v349, 7
    %v351 = vsub.s32 %v348, %v350
    %v352 = vrot.slane %v330, %v351
    %v354 = vunpack.c.l.s4 1966171168
    %v355 = vunpack.c.0.s8 %v354
    %v356 = vlaneseq
    %v357 = vshrl.u32 %v356, 7
    %v358 = vsub.s32 %v355, %v357
    %v359 = vrot.slane %v331, %v358
    %v360 = vcombine.high %v338, %v338
    %v361 = vcombine.high %v345, %v345
    %v362 = vcombine.high %v352, %v352
    %v363 = vcombine.high %v359, %v359
    %v364 = vlaneseq
    %v365 = vshrl.u32 %v364, 7
    %v366 = vsub.s32 0, %v365
    %v367 = vrot.slane %v338, %v366
    %v368 = vlaneseq
    %v369 = vshrl.u32 %v368, 7
    %v370 = vsub.s32 0, %v369
    %v371 = vrot.slane %v352, %v370
    %v372 = vlaneseq
    %v373 = vshrl.u32 %v372, 7
    %v374 = vsub.s32 0, %v373
    %v375 = vrot.slane %v360, %v374
    %v376 = vlaneseq
    %v377 = vshrl.u32 %v376, 7
    %v378 = vsub.s32 0, %v377
    %v379 = vrot.slane %v362, %v378
    %v380 = vlaneseq
    %v381 = vshrl.u32 %v380, 7
    %v382 = vsub.s32 0, %v381
    %v383 = vrot.slane %v345, %v382
    %v384 = vlaneseq
    %v385 = vshrl.u32 %v384, 7
    %v386 = vsub.s32 0, %v385
    %v387 = vrot.slane %v359, %v386
    %v388 = vlaneseq
    %v389 = vshrl.u32 %v388, 7
    %v390 = vsub.s32 0, %v389
    %v391 = vrot.slane %v361, %v390
    %v392 = vlaneseq
    %v393 = vshrl.u32 %v392, 7
    %v394 = vsub.s32 0, %v393
    %v395 = vrot.slane %v363, %v394
    %v404 = vadd.f32 %v367, %v276
    %v405 = vadd.f32 %v371, %v281
    %v406 = vadd.f32 %v375, %v286
    %v407 = vadd.f32 %v379, %v291
    %v408 = vadd.f32 %v383, %v296
    %v409 = vadd.f32 %v387, %v301
    %v410 = vadd.f32 %v391, %v306
    %v411 = vadd.f32 %v395, %v311
    %v412 = vtanh.pop %v404
    %v413 = vtanh.pop %v405
    %v414 = vtanh.pop %v406
    %v415 = vtanh.pop %v407
    %v416 = vtanh.pop %v408
    %v417 = vtanh.pop %v409
    %v418 = vtanh.pop %v410
    %v419 = vtanh.pop %v411
    %v420 = vld [vmem:[%s7] sm:$0x1]
    %v422 = vlaneseq
    %v423 = vshrl.u32 %v422, 7
    %v424 = vsub.s32 0, %v423
    %v425 = vrot.slane %v420, %v424
    %v427 = vmul.f32 %v412, %v425
    %v428 = vmul.f32 %v413, %v425
    %v429 = vmul.f32 %v414, %v425
    %v430 = vmul.f32 %v415, %v425
    %v431 = vmul.f32 %v416, %v425
    %v432 = vmul.f32 %v417, %v425
    %v433 = vmul.f32 %v418, %v425
    %v434 = vmul.f32 %v419, %v425
    %435 = vadd.xlane.f32.xlu0 %v427
    %v436 = vpop.xlane.xlu0 %435
    %437 = vadd.xlane.f32.xlu0 %v428
    %v438 = vpop.xlane.xlu0 %437
    %439 = vadd.xlane.f32.xlu0 %v429
    %v440 = vpop.xlane.xlu0 %439
    %441 = vadd.xlane.f32.xlu0 %v430
    %v442 = vpop.xlane.xlu0 %441
    %443 = vadd.xlane.f32.xlu0 %v431
    %v444 = vpop.xlane.xlu0 %443
    %445 = vadd.xlane.f32.xlu0 %v432
    %v446 = vpop.xlane.xlu0 %445
    %447 = vadd.xlane.f32.xlu0 %v433
    %v448 = vpop.xlane.xlu0 %447
    %449 = vadd.xlane.f32.xlu0 %v434
    %v450 = vpop.xlane.xlu0 %449
    %v451 = vld [vmem:[#allocation7] sm:$0xf]
    %v452 = vunpack.c.l.bf16 %v451
    %v454 = vlaneseq
    %v455 = vshrl.u32 %v454, 7
    %v456 = vsub.s32 0, %v455
    %v457 = vrot.slane %v452, %v456
    %459 = vbcast.lane.b32.xlu0 %v457, 256
    %v460 = vpop.permute.xlu0 %459
    %v461 = vlaneseq
    %v462 = vshrl.u32 %v461, 7
    %v463 = vsub.s32 1, %v462
    %v464 = vrot.slane %v452, %v463
    %466 = vbcast.lane.b32.xlu0 %v464, 256
    %v467 = vpop.permute.xlu0 %466
    %v468 = vlaneseq
    %v469 = vshrl.u32 %v468, 7
    %v470 = vsub.s32 2, %v469
    %v471 = vrot.slane %v452, %v470
    %473 = vbcast.lane.b32.xlu0 %v471, 256
    %v474 = vpop.permute.xlu0 %473
    %v475 = vlaneseq
    %v476 = vshrl.u32 %v475, 7
    %v477 = vsub.s32 3, %v476
    %v478 = vrot.slane %v452, %v477
    %480 = vbcast.lane.b32.xlu0 %v478, 256
    %v481 = vpop.permute.xlu0 %480
    %v482 = vlaneseq
    %v483 = vshrl.u32 %v482, 7
    %v484 = vsub.s32 4, %v483
    %v485 = vrot.slane %v452, %v484
    %487 = vbcast.lane.b32.xlu0 %v485, 256
    %v488 = vpop.permute.xlu0 %487
    %v489 = vlaneseq
    %v490 = vshrl.u32 %v489, 7
    %v491 = vsub.s32 5, %v490
    %v492 = vrot.slane %v452, %v491
    %494 = vbcast.lane.b32.xlu0 %v492, 256
    %v495 = vpop.permute.xlu0 %494
    %v496 = vlaneseq
    %v497 = vshrl.u32 %v496, 7
    %v498 = vsub.s32 6, %v497
    %v499 = vrot.slane %v452, %v498
    %501 = vbcast.lane.b32.xlu0 %v499, 256
    %v502 = vpop.permute.xlu0 %501
    %v503 = vlaneseq
    %v504 = vshrl.u32 %v503, 7
    %v505 = vsub.s32 7, %v504
    %v506 = vrot.slane %v452, %v505
    %508 = vbcast.lane.b32.xlu0 %v506, 256
    %v509 = vpop.permute.xlu0 %508
    %v518 = vadd.f32 %v436, %v460
    %v519 = vadd.f32 %v438, %v467
    %v520 = vadd.f32 %v440, %v474
    %v521 = vadd.f32 %v442, %v481
    %v522 = vadd.f32 %v444, %v488
    %v523 = vadd.f32 %v446, %v495
    %v524 = vadd.f32 %v448, %v502
    %v525 = vadd.f32 %v450, %v509
    %534 = vset.pattern.permute.xlu0 0
    %535 = vperm.xlu0 %534, %v518
    %v536 = vpop.permute.xlu0 %535
    %537 = vset.pattern.permute.xlu0 0
    %538 = vperm.xlu0 %537, %v519
    %v539 = vpop.permute.xlu0 %538
    %540 = vset.pattern.permute.xlu0 0
    %541 = vperm.xlu0 %540, %v520
    %v542 = vpop.permute.xlu0 %541
    %543 = vset.pattern.permute.xlu0 0
    %544 = vperm.xlu0 %543, %v521
    %v545 = vpop.permute.xlu0 %544
    %546 = vset.pattern.permute.xlu0 0
    %547 = vperm.xlu0 %546, %v522
    %v548 = vpop.permute.xlu0 %547
    %549 = vset.pattern.permute.xlu0 0
    %550 = vperm.xlu0 %549, %v523
    %v551 = vpop.permute.xlu0 %550
    %552 = vset.pattern.permute.xlu0 0
    %553 = vperm.xlu0 %552, %v524
    %v554 = vpop.permute.xlu0 %553
    %555 = vset.pattern.permute.xlu0 0
    %556 = vperm.xlu0 %555, %v525
    %v557 = vpop.permute.xlu0 %556
    %v558 = vlaneseq
    %v559 = vand.u32 %v558, 127
    %v560 = vlaneseq
    %v561 = vshrl.u32 %v560, 7
    %v562 = vsub.s32 %v559, %v561
    %v563 = vrot.slane %v536, %v562
    %v564 = vlaneseq
    %v565 = vshrl.u32 %v564, 7
    %v566 = vsub.s32 %v559, %v565
    %v567 = vrot.slane %v539, %v566
    %v568 = vlaneseq
    %v569 = vshrl.u32 %v568, 7
    %v570 = vsub.s32 %v559, %v569
    %v571 = vrot.slane %v542, %v570
    %v572 = vlaneseq
    %v573 = vshrl.u32 %v572, 7
    %v574 = vsub.s32 %v559, %v573
    %v575 = vrot.slane %v545, %v574
    %v576 = vlaneseq
    %v577 = vshrl.u32 %v576, 7
    %v578 = vsub.s32 %v559, %v577
    %v579 = vrot.slane %v548, %v578
    %v580 = vlaneseq
    %v581 = vshrl.u32 %v580, 7
    %v582 = vsub.s32 %v559, %v581
    %v583 = vrot.slane %v551, %v582
    %v584 = vlaneseq
    %v585 = vshrl.u32 %v584, 7
    %v586 = vsub.s32 %v559, %v585
    %v587 = vrot.slane %v554, %v586
    %v588 = vlaneseq
    %v589 = vshrl.u32 %v588, 7
    %v590 = vsub.s32 %v559, %v589
    %v591 = vrot.slane %v557, %v590
    %vm592 = vcmask 1041409
    %v593 = vsel %vm592, %v567, %v563
    %vm594 = vcmask 1042434
    %v595 = vsel %vm594, %v571, %v593
    %vm596 = vcmask 1043459
    %v597 = vsel %vm596, %v575, %v595
    %vm598 = vcmask 1044484
    %v599 = vsel %vm598, %v579, %v597
    %vm600 = vcmask 1045509
    %v601 = vsel %vm600, %v583, %v599
    %vm602 = vcmask 1046534
    %v603 = vsel %vm602, %v587, %v601
    %vm604 = vcmask 1047559
    %v605 = vsel %vm604, %v591, %v603
    %vm607 = vcmask 64512
    %v608 = vsel %vm607, %v605, -inf
    %609 = vmax.xlane.f32.xlu0 %v608
    %v610 = vpop.xlane.xlu0 %609
    %v612 = vlaneseq
    %v613 = vshrl.u32 %v612, 7
    %v614 = vsub.s32 0, %v613
    %v615 = vrot.slane %v610, %v614
    %v616 = vlaneseq
    %v617 = vshrl.u32 %v616, 7
    %v618 = vsub.s32 1, %v617
    %v619 = vrot.slane %v610, %v618
    %v620 = vlaneseq
    %v621 = vshrl.u32 %v620, 7
    %v622 = vsub.s32 2, %v621
    %v623 = vrot.slane %v610, %v622
    %v624 = vlaneseq
    %v625 = vshrl.u32 %v624, 7
    %v626 = vsub.s32 3, %v625
    %v627 = vrot.slane %v610, %v626
    %v628 = vlaneseq
    %v629 = vshrl.u32 %v628, 7
    %v630 = vsub.s32 4, %v629
    %v631 = vrot.slane %v610, %v630
    %v632 = vlaneseq
    %v633 = vshrl.u32 %v632, 7
    %v634 = vsub.s32 5, %v633
    %v635 = vrot.slane %v610, %v634
    %v636 = vlaneseq
    %v637 = vshrl.u32 %v636, 7
    %v638 = vsub.s32 6, %v637
    %v639 = vrot.slane %v610, %v638
    %v640 = vlaneseq
    %v641 = vshrl.u32 %v640, 7
    %v642 = vsub.s32 7, %v641
    %v643 = vrot.slane %v610, %v642
    %v652 = vsub.f32 %v518, %v615
    %v653 = vsub.f32 %v519, %v619
    %v654 = vsub.f32 %v520, %v623
    %v655 = vsub.f32 %v521, %v627
    %v656 = vsub.f32 %v522, %v631
    %v657 = vsub.f32 %v523, %v635
    %v658 = vsub.f32 %v524, %v639
    %v659 = vsub.f32 %v525, %v643
    %v660 = vmul.f32 %v652, 1.442695
    %v661 = vpow.pop %v660
    %v662 = vmul.f32 %v653, 1.442695
    %v663 = vpow.pop %v662
    %v664 = vmul.f32 %v654, 1.442695
    %v665 = vpow.pop %v664
    %v666 = vmul.f32 %v655, 1.442695
    %v667 = vpow.pop %v666
    %v668 = vmul.f32 %v656, 1.442695
    %v669 = vpow.pop %v668
    %v670 = vmul.f32 %v657, 1.442695
    %v671 = vpow.pop %v670
    %v672 = vmul.f32 %v658, 1.442695
    %v673 = vpow.pop %v672
    %v674 = vmul.f32 %v659, 1.442695
    %v675 = vpow.pop %v674
    %684 = vset.pattern.permute.xlu0 0
    %685 = vperm.xlu0 %684, %v661
    %v686 = vpop.permute.xlu0 %685
    %687 = vset.pattern.permute.xlu0 0
    %688 = vperm.xlu0 %687, %v663
    %v689 = vpop.permute.xlu0 %688
    %690 = vset.pattern.permute.xlu0 0
    %691 = vperm.xlu0 %690, %v665
    %v692 = vpop.permute.xlu0 %691
    %693 = vset.pattern.permute.xlu0 0
    %694 = vperm.xlu0 %693, %v667
    %v695 = vpop.permute.xlu0 %694
    %696 = vset.pattern.permute.xlu0 0
    %697 = vperm.xlu0 %696, %v669
    %v698 = vpop.permute.xlu0 %697
    %699 = vset.pattern.permute.xlu0 0
    %700 = vperm.xlu0 %699, %v671
    %v701 = vpop.permute.xlu0 %700
    %702 = vset.pattern.permute.xlu0 0
    %703 = vperm.xlu0 %702, %v673
    %v704 = vpop.permute.xlu0 %703
    %705 = vset.pattern.permute.xlu0 0
    %706 = vperm.xlu0 %705, %v675
    %v707 = vpop.permute.xlu0 %706
    %v708 = vlaneseq
    %v709 = vshrl.u32 %v708, 7
    %v710 = vsub.s32 %v559, %v709
    %v711 = vrot.slane %v686, %v710
    %v712 = vlaneseq
    %v713 = vshrl.u32 %v712, 7
    %v714 = vsub.s32 %v559, %v713
    %v715 = vrot.slane %v689, %v714
    %v716 = vlaneseq
    %v717 = vshrl.u32 %v716, 7
    %v718 = vsub.s32 %v559, %v717
    %v719 = vrot.slane %v692, %v718
    %v720 = vlaneseq
    %v721 = vshrl.u32 %v720, 7
    %v722 = vsub.s32 %v559, %v721
    %v723 = vrot.slane %v695, %v722
    %v724 = vlaneseq
    %v725 = vshrl.u32 %v724, 7
    %v726 = vsub.s32 %v559, %v725
    %v727 = vrot.slane %v698, %v726
    %v728 = vlaneseq
    %v729 = vshrl.u32 %v728, 7
    %v730 = vsub.s32 %v559, %v729
    %v731 = vrot.slane %v701, %v730
    %v732 = vlaneseq
    %v733 = vshrl.u32 %v732, 7
    %v734 = vsub.s32 %v559, %v733
    %v735 = vrot.slane %v704, %v734
    %v736 = vlaneseq
    %v737 = vshrl.u32 %v736, 7
    %v738 = vsub.s32 %v559, %v737
    %v739 = vrot.slane %v707, %v738
    %v740 = vsel %vm592, %v715, %v711
    %v741 = vsel %vm594, %v719, %v740
    %v742 = vsel %vm596, %v723, %v741
    %v743 = vsel %vm598, %v727, %v742
    %v744 = vsel %vm600, %v731, %v743
    %v745 = vsel %vm602, %v735, %v744
    %v746 = vsel %vm604, %v739, %v745
    %v748 = vsel %vm607, %v746, 0.0
    %749 = vadd.xlane.f32.xlu0 %v748
    %v750 = vpop.xlane.xlu0 %749
    %v752 = vlaneseq
    %v753 = vshrl.u32 %v752, 7
    %v754 = vsub.s32 0, %v753
    %v755 = vrot.slane %v750, %v754
    %v756 = vlaneseq
    %v757 = vshrl.u32 %v756, 7
    %v758 = vsub.s32 1, %v757
    %v759 = vrot.slane %v750, %v758
    %v760 = vlaneseq
    %v761 = vshrl.u32 %v760, 7
    %v762 = vsub.s32 2, %v761
    %v763 = vrot.slane %v750, %v762
    %v764 = vlaneseq
    %v765 = vshrl.u32 %v764, 7
    %v766 = vsub.s32 3, %v765
    %v767 = vrot.slane %v750, %v766
    %v768 = vlaneseq
    %v769 = vshrl.u32 %v768, 7
    %v770 = vsub.s32 4, %v769
    %v771 = vrot.slane %v750, %v770
    %v772 = vlaneseq
    %v773 = vshrl.u32 %v772, 7
    %v774 = vsub.s32 5, %v773
    %v775 = vrot.slane %v750, %v774
    %v776 = vlaneseq
    %v777 = vshrl.u32 %v776, 7
    %v778 = vsub.s32 6, %v777
    %v779 = vrot.slane %v750, %v778
    %v780 = vlaneseq
    %v781 = vshrl.u32 %v780, 7
    %v782 = vsub.s32 7, %v781
    %v783 = vrot.slane %v750, %v782
    %v792 = vrcp.pop %v755
    %v793 = vmul.f32 %v661, %v792
    %v794 = vrcp.pop %v759
    %v795 = vmul.f32 %v663, %v794
    %v796 = vrcp.pop %v763
    %v797 = vmul.f32 %v665, %v796
    %v798 = vrcp.pop %v767
    %v799 = vmul.f32 %v667, %v798
    %v800 = vrcp.pop %v771
    %v801 = vmul.f32 %v669, %v800
    %v802 = vrcp.pop %v775
    %v803 = vmul.f32 %v671, %v802
    %v804 = vrcp.pop %v779
    %v805 = vmul.f32 %v673, %v804
    %v806 = vrcp.pop %v783
    %v807 = vmul.f32 %v675, %v806
    %816 = vset.pattern.permute.xlu0 0
    %817 = vperm.xlu0 %816, %v793
    %v818 = vpop.permute.xlu0 %817
    %819 = vset.pattern.permute.xlu0 0
    %820 = vperm.xlu0 %819, %v795
    %v821 = vpop.permute.xlu0 %820
    %822 = vset.pattern.permute.xlu0 0
    %823 = vperm.xlu0 %822, %v797
    %v824 = vpop.permute.xlu0 %823
    %825 = vset.pattern.permute.xlu0 0
    %826 = vperm.xlu0 %825, %v799
    %v827 = vpop.permute.xlu0 %826
    %828 = vset.pattern.permute.xlu0 0
    %829 = vperm.xlu0 %828, %v801
    %v830 = vpop.permute.xlu0 %829
    %831 = vset.pattern.permute.xlu0 0
    %832 = vperm.xlu0 %831, %v803
    %v833 = vpop.permute.xlu0 %832
    %834 = vset.pattern.permute.xlu0 0
    %835 = vperm.xlu0 %834, %v805
    %v836 = vpop.permute.xlu0 %835
    %837 = vset.pattern.permute.xlu0 0
    %838 = vperm.xlu0 %837, %v807
    %v839 = vpop.permute.xlu0 %838
    %v840 = vlaneseq
    %v841 = vshrl.u32 %v840, 7
    %v842 = vsub.s32 %v559, %v841
    %v843 = vrot.slane %v818, %v842
    %v844 = vlaneseq
    %v845 = vshrl.u32 %v844, 7
    %v846 = vsub.s32 %v559, %v845
    %v847 = vrot.slane %v821, %v846
    %v848 = vlaneseq
    %v849 = vshrl.u32 %v848, 7
    %v850 = vsub.s32 %v559, %v849
    %v851 = vrot.slane %v824, %v850
    %v852 = vlaneseq
    %v853 = vshrl.u32 %v852, 7
    %v854 = vsub.s32 %v559, %v853
    %v855 = vrot.slane %v827, %v854
    %v856 = vlaneseq
    %v857 = vshrl.u32 %v856, 7
    %v858 = vsub.s32 %v559, %v857
    %v859 = vrot.slane %v830, %v858
    %v860 = vlaneseq
    %v861 = vshrl.u32 %v860, 7
    %v862 = vsub.s32 %v559, %v861
    %v863 = vrot.slane %v833, %v862
    %v864 = vlaneseq
    %v865 = vshrl.u32 %v864, 7
    %v866 = vsub.s32 %v559, %v865
    %v867 = vrot.slane %v836, %v866
    %v868 = vlaneseq
    %v869 = vshrl.u32 %v868, 7
    %v870 = vsub.s32 %v559, %v869
    %v871 = vrot.slane %v839, %v870
    %v872 = vsel %vm592, %v847, %v843
    %v873 = vsel %vm594, %v851, %v872
    %v874 = vsel %vm596, %v855, %v873
    %v875 = vsel %vm598, %v859, %v874
    %v876 = vsel %vm600, %v863, %v875
    %v877 = vsel %vm602, %v867, %v876
    %v878 = vsel %vm604, %v871, %v877
    %880 = vst.msk [vmem:[#allocation11] sm:$0xff] %vm607, %v878
    %v889 = vmul.f32 %v818, %v276
    %v890 = vmul.f32 %v821, %v281
    %v891 = vmul.f32 %v824, %v286
    %v892 = vmul.f32 %v827, %v291
    %v893 = vmul.f32 %v830, %v296
    %v894 = vmul.f32 %v833, %v301
    %v895 = vmul.f32 %v836, %v306
    %v896 = vmul.f32 %v839, %v311
    %v897 = vrot.slane %v889, 4
    %v898 = vadd.f32 %v889, %v897
    %v899 = vrot.slane %v898, 2
    %v900 = vadd.f32 %v898, %v899
    %v901 = vrot.slane %v900, 1
    %v902 = vadd.f32 %v900, %v901
    %v903 = vrot.slane %v890, 4
    %v904 = vadd.f32 %v890, %v903
    %v905 = vrot.slane %v904, 2
    %v906 = vadd.f32 %v904, %v905
    %v907 = vrot.slane %v906, 1
    %v908 = vadd.f32 %v906, %v907
    %v909 = vrot.slane %v891, 4
    %v910 = vadd.f32 %v891, %v909
    %v911 = vrot.slane %v910, 2
    %v912 = vadd.f32 %v910, %v911
    %v913 = vrot.slane %v912, 1
    %v914 = vadd.f32 %v912, %v913
    %v915 = vrot.slane %v892, 4
    %v916 = vadd.f32 %v892, %v915
    %v917 = vrot.slane %v916, 2
    %v918 = vadd.f32 %v916, %v917
    %v919 = vrot.slane %v918, 1
    %v920 = vadd.f32 %v918, %v919
    %v921 = vrot.slane %v893, 4
    %v922 = vadd.f32 %v893, %v921
    %v923 = vrot.slane %v922, 2
    %v924 = vadd.f32 %v922, %v923
    %v925 = vrot.slane %v924, 1
    %v926 = vadd.f32 %v924, %v925
    %v927 = vrot.slane %v894, 4
    %v928 = vadd.f32 %v894, %v927
    %v929 = vrot.slane %v928, 2
    %v930 = vadd.f32 %v928, %v929
    %v931 = vrot.slane %v930, 1
    %v932 = vadd.f32 %v930, %v931
    %v933 = vrot.slane %v895, 4
    %v934 = vadd.f32 %v895, %v933
    %v935 = vrot.slane %v934, 2
    %v936 = vadd.f32 %v934, %v935
    %v937 = vrot.slane %v936, 1
    %v938 = vadd.f32 %v936, %v937
    %v939 = vrot.slane %v896, 4
    %v940 = vadd.f32 %v896, %v939
    %v941 = vrot.slane %v940, 2
    %v942 = vadd.f32 %v940, %v941
    %v943 = vrot.slane %v942, 1
    %v944 = vadd.f32 %v942, %v943
    %v953 = vsel %vm592, %v908, %v902
    %v954 = vsel %vm594, %v914, %v953
    %v955 = vsel %vm596, %v920, %v954
    %v956 = vsel %vm598, %v926, %v955
    %v957 = vsel %vm600, %v932, %v956
    %v958 = vsel %vm602, %v938, %v957
    %v959 = vsel %vm604, %v944, %v958
    %961 = vst [vmem:[#allocation10] sm:$0xff] %v959
    // Predicated region
    $region50: #{tpu_custom_call.1} parent=1 // pred_check
      _
    $region51: #{tpu_custom_call.1} parent=1 // pred_check_branch
      %963 = sbr.rel (0) target = $region53
    $region52: #{tpu_custom_call.1} parent=1 // pred_region
      %s965 = ssub.s32 128, 128
      %966 = vsyncadd [#allocation4], %s965
      %s968 = sshll.u32 [#allocation10], 4
      %s969 = int_to_ptr.vmem [resolvable:$true] %s968
      %971 = dma.vmem_to_hbm [thread:$0]  %s969, 128, %s8, [#allocation4]
    $region53: #{tpu_custom_call.1} parent=1 // pred_fallthru
      _
    // Predicated region
    $region54: #{tpu_custom_call.1} parent=1 // pred_check
      _
    $region55: #{tpu_custom_call.1} parent=1 // pred_check_branch
      %973 = sbr.rel (0) target = $region57
    $region56: #{tpu_custom_call.1} parent=1 // pred_region
      %s975 = ssub.s32 128, 128
      %976 = vsyncadd [#allocation12], %s975
      %s978 = sshll.u32 [#allocation11], 4
      %s979 = int_to_ptr.vmem [resolvable:$true] %s978
      %981 = dma.vmem_to_hbm [thread:$0]  %s979, 128, %s9, [#allocation12]
    $region57: #{tpu_custom_call.1} parent=1 // pred_fallthru
      _
    // Predicated region
    $region58: #{tpu_custom_call.1} parent=1 // pred_check
      _
    $region59: #{tpu_custom_call.1} parent=1 // pred_check_branch
      %983 = sbr.rel (0) target = $region61
    $region60: #{tpu_custom_call.1} parent=1 // pred_region
      %984 = dma.done [#allocation4], 128
    $region61: #{tpu_custom_call.1} parent=1 // pred_fallthru
      _
    // Predicated region
    $region62: #{tpu_custom_call.1} parent=1 // pred_check
      _
    $region63: #{tpu_custom_call.1} parent=1 // pred_check_branch
      %986 = sbr.rel (0) target = $region65
    $region64: #{tpu_custom_call.1} parent=1 // pred_region
      %987 = dma.done [#allocation12], 128
    $region65: #{tpu_custom_call.1} parent=1 // pred_fallthru
      _
    %988 = vsyncpa [#allocation3], 1
    %989 = vsyncpa [#allocation6], 1
    %990 = vsyncpa [#allocation9], 1
    %991 = vsyncpa [#allocation4], 1
    %992 = vsyncpa [#allocation12], 1

</llo_original>
